<compile_context>
chip_gen: v7x
topology: tpu7x:2x2x1
jax: 0.10.0
libtpu: 0.0.40
codegen_flags: <defaults>
</compile_context>

<pallas_src>
import jax
import jax.numpy as jnp
from jax.experimental import pallas as pl
from jax.experimental.pallas import tpu as pltpu

BN_EPS = 1e-5
SQRT_HALF = 0.7071067811865476
SQRT_2_OVER_PI = 0.7978845608028654
GELU_C = 0.044715


def _round_up(x, m):
    return ((x + m - 1) // m) * m


def _conv_bn_gelu_kernel(p_ref, w_ref, scale_ref, shift_ref, o_ref):
    # MXU: bf16 patch rows @ bf16 weights with f32 accumulation.
    acc = jnp.dot(p_ref[...], w_ref[...], preferred_element_type=jnp.float32)
    # Folded BatchNorm affine (conv bias already folded into shift on the host).
    y = acc * scale_ref[...] + shift_ref[...]
    # tanh-based GELU: single EUP transcendental, low VALU pressure.
    inner = SQRT_2_OVER_PI * (y + GELU_C * y * y * y)
    o_ref[...] = (0.5 * y * (1.0 + jnp.tanh(inner))).astype(o_ref.dtype)


def _base_conv_pallas(x_nhwc, p):
    """One BaseConv block: conv3x3/s2/p1 + BN(eval) + GELU.  NHWC in, NHWC out."""
    w, b = p["w"], p["b"]
    gamma, beta, mean, var = p["gamma"], p["beta"], p["mean"], p["var"]
    N, H, W, Cin = x_nhwc.shape
    Cout = w.shape[0]
    Ho, Wo = H // 2, W // 2
    K = 9 * Cin

    # --- im2col directly from NHWC (layout glue, plain JAX) -------------------
    xp = jnp.pad(x_nhwc, ((0, 0), (1, 1), (1, 1), (0, 0)))
    cols = []
    for kh in range(3):
        for kw in range(3):
            cols.append(xp[:, kh:kh + 2 * Ho:2, kw:kw + 2 * Wo:2, :])
    # (N, Ho, Wo, 9, Cin) -> (M, K); feature order (kh, kw, Cin)
    patches = jnp.stack(cols, axis=3).reshape(N * Ho * Wo, K).astype(jnp.bfloat16)

    # weight (Cout, Cin, 3, 3) -> (kh, kw, Cin, Cout) -> (K, Cout): matches patch order.
    wm = w.transpose(2, 3, 1, 0).reshape(K, Cout)

    # Fold BN (eval) and the conv bias into one per-channel affine:
    #   (acc + b - mean) * gamma / sqrt(var+eps) + beta  ==  acc*scale + shift
    inv = gamma / jnp.sqrt(var + BN_EPS)
    scale = inv
    shift = (b - mean) * inv + beta

    M = N * Ho * Wo
    # Lane-dense output: pad Cout up to a multiple of 128 (sliced off below).
    Cp = _round_up(Cout, 128)
    # M tile: 256 rows for real sizes, else the whole (8-aligned) problem.
    tm = min(256, _round_up(M, 8))
    Mp = _round_up(M, tm)

    patches = jnp.pad(patches, ((0, Mp - M), (0, 0)))
    wm = jnp.pad(wm, ((0, 0), (0, Cp - Cout))).astype(jnp.bfloat16)
    scale = jnp.pad(scale, (0, Cp - Cout)).reshape(1, Cp).astype(jnp.float32)
    shift = jnp.pad(shift, (0, Cp - Cout)).reshape(1, Cp).astype(jnp.float32)

    grid = (Mp // tm,)
    out = pl.pallas_call(
        _conv_bn_gelu_kernel,
        out_shape=jax.ShapeDtypeStruct((Mp, Cp), jnp.float32),
        grid_spec=pltpu.PrefetchScalarGridSpec(
            num_scalar_prefetch=0,
            grid=grid,
            in_specs=[
                pl.BlockSpec((tm, K), lambda i: (i, 0)),     # patch rows (streamed)
                pl.BlockSpec((K, Cp), lambda i: (0, 0)),     # weights (resident)
                pl.BlockSpec((1, Cp), lambda i: (0, 0)),     # BN scale
                pl.BlockSpec((1, Cp), lambda i: (0, 0)),     # BN shift (+bias)
            ],
            out_specs=pl.BlockSpec((tm, Cp), lambda i: (i, 0)),
        ),
        compiler_params=pltpu.CompilerParams(
            dimension_semantics=("parallel",)),
    )(patches, wm, scale, shift)

    # Strip M / Cout padding and keep activations NHWC for the next layer.
    return out[:M, :Cout].reshape(N, Ho, Wo, Cout)


def overlap_patch_embed(x_nchw, params):
    """OverlapPatchEmbed.forward: two BaseConv blocks, flatten(2), permute(0,2,1)."""
    y = x_nchw.transpose(0, 2, 3, 1)   # single NCHW -> NHWC transpose at the boundary
    for p in params:
        y = _base_conv_pallas(y, p)
    N, H, W, C = y.shape
    # torch: flatten(2).permute(0,2,1) on NCHW  ==  plain reshape in NHWC
    return y.reshape(N, H * W, C)


# ------------------------- pure-JAX reference ---------------------------------
def _ref_base_conv(x, p):
    y = jax.lax.conv_general_dilated(
        x, p["w"], window_strides=(2, 2), padding=((1, 1), (1, 1)),
        dimension_numbers=("NCHW", "OIHW", "NCHW"))
    y = y + p["b"][None, :, None, None]
    inv = 1.0 / jnp.sqrt(p["var"] + BN_EPS)
    y = ((y - p["mean"][None, :, None, None]) * (p["gamma"] * inv)[None, :, None, None]
         + p["beta"][None, :, None, None])
    return 0.5 * y * (1.0 + jax.lax.erf(y * SQRT_HALF))


def _ref_forward(x, params):
    y = x
    for p in params:
        y = _ref_base_conv(y, p)
    N, C, H, W = y.shape
    return y.reshape(N, C, H * W).transpose(0, 2, 1)


# ------------------------- deterministic params --------------------------------
def make_params(key, in_channels, embed_dims, num_layers=2):
    params = []
    cin = in_channels
    for num in range(num_layers, 0, -1):
        cout = embed_dims // (2 ** (num - 1))
        key, kw, kb, kg, kbe, km, kv = jax.random.split(key, 7)
        params.append(dict(
            w=0.1 * jax.random.normal(kw, (cout, cin, 3, 3), jnp.float32),
            b=0.1 * jax.random.normal(kb, (cout,), jnp.float32),
            gamma=1.0 + 0.1 * jax.random.normal(kg, (cout,), jnp.float32),
            beta=0.1 * jax.random.normal(kbe, (cout,), jnp.float32),
            mean=0.05 * jax.random.normal(km, (cout,), jnp.float32),
            var=0.5 + 0.1 * jnp.abs(jax.random.normal(kv, (cout,), jnp.float32)),
        ))
        cin = cout
    return params


if __name__ == "__main__":
    N, C, H, W = 2, 4, 16, 16
    embed_dims = 32

    key = jax.random.PRNGKey(0)
    key, kx = jax.random.split(key)
    x = jax.random.normal(kx, (N, C, H, W), jnp.float32)
    params = make_params(key, in_channels=C, embed_dims=embed_dims, num_layers=2)

    out = jax.block_until_ready(overlap_patch_embed(x, params))
    assert out.shape == (N, (H * W) // 16, embed_dims), out.shape

    ref = jax.block_until_ready(_ref_forward(x, params))
    assert jnp.allclose(out, ref, atol=5e-2, rtol=5e-2), float(jnp.max(jnp.abs(out - ref)))

    print("KERNEL_OK")
</pallas_src>

<mosaic_0001>
module attributes {stable_mosaic.version = 11 : i64} {
  func.func @_conv_bn_gelu_kernel(%arg0: i32, %arg1: memref<128x36xbf16, #tpu.memory_space<vmem>>, %arg2: memref<36x128xbf16, #tpu.memory_space<vmem>>, %arg3: memref<1x128xf32, #tpu.memory_space<vmem>>, %arg4: memref<1x128xf32, #tpu.memory_space<vmem>>, %arg5: memref<128x128xf32, #tpu.memory_space<vmem>>) attributes {dimension_semantics = [#tpu.dimension_semantics<parallel>], iteration_bounds = array<i64: 1>, scalar_prefetch = 0 : i64, scratch_operands = 0 : i64, tpu.core_type = #tpu.core_type<tc>, window_params = [{transform_indices = @transform_0, window_bounds = array<i64: 128, 36>}, {pipeline_mode = #tpu.pipeline_mode<synchronous>, transform_indices = @transform_1, window_bounds = array<i64: 36, 128>}, {pipeline_mode = #tpu.pipeline_mode<synchronous>, transform_indices = @transform_2, window_bounds = array<i64: 1, 128>}, {pipeline_mode = #tpu.pipeline_mode<synchronous>, transform_indices = @transform_3, window_bounds = array<i64: 1, 128>}, {transform_indices = @transform_4, window_bounds = array<i64: 128, 128>}]} {
    %c0 = arith.constant 0 : index
    %c0_0 = arith.constant 0 : index
    %0 = vector.load %arg1[%c0, %c0_0] : memref<128x36xbf16, #tpu.memory_space<vmem>>, vector<128x36xbf16>
    %c0_1 = arith.constant 0 : index
    %c0_2 = arith.constant 0 : index
    %1 = vector.load %arg2[%c0_1, %c0_2] : memref<36x128xbf16, #tpu.memory_space<vmem>>, vector<36x128xbf16>
    %cst = arith.constant dense<0.000000e+00> : vector<128x128xf32>
    %2 = tpu.matmul %0, %1, %cst {dimension_numbers = #tpu.dot_dimension_numbers<[1], [0], [0], [1], [0, 0, 1, 1], [], []>} : vector<128x36xbf16>, vector<36x128xbf16>, vector<128x128xf32> -> vector<128x128xf32>
    %c0_3 = arith.constant 0 : index
    %c0_4 = arith.constant 0 : index
    %3 = vector.load %arg3[%c0_3, %c0_4] : memref<1x128xf32, #tpu.memory_space<vmem>>, vector<1x128xf32>
    %4 = vector.broadcast %3 : vector<1x128xf32> to vector<128x128xf32>
    %5 = arith.mulf %2, %4 : vector<128x128xf32>
    %c0_5 = arith.constant 0 : index
    %c0_6 = arith.constant 0 : index
    %6 = vector.load %arg4[%c0_5, %c0_6] : memref<1x128xf32, #tpu.memory_space<vmem>>, vector<1x128xf32>
    %7 = vector.broadcast %6 : vector<1x128xf32> to vector<128x128xf32>
    %8 = arith.addf %5, %7 : vector<128x128xf32>
    %cst_7 = arith.constant 4.471500e-02 : f32
    %9 = vector.broadcast %cst_7 : f32 to vector<128x128xf32>
    %10 = arith.mulf %9, %8 : vector<128x128xf32>
    %11 = arith.mulf %10, %8 : vector<128x128xf32>
    %12 = arith.mulf %11, %8 : vector<128x128xf32>
    %13 = arith.addf %8, %12 : vector<128x128xf32>
    %cst_8 = arith.constant 0.797884583 : f32
    %14 = vector.broadcast %cst_8 : f32 to vector<128x128xf32>
    %15 = arith.mulf %14, %13 : vector<128x128xf32>
    %cst_9 = arith.constant 5.000000e-01 : f32
    %16 = vector.broadcast %cst_9 : f32 to vector<128x128xf32>
    %17 = arith.mulf %16, %8 : vector<128x128xf32>
    %18 = math.tanh %15 : vector<128x128xf32>
    %cst_10 = arith.constant 1.000000e+00 : f32
    %19 = vector.broadcast %cst_10 : f32 to vector<128x128xf32>
    %20 = arith.addf %19, %18 : vector<128x128xf32>
    %21 = arith.mulf %17, %20 : vector<128x128xf32>
    %c0_11 = arith.constant 0 : index
    %c0_12 = arith.constant 0 : index
    %22 = vector.load %arg5[%c0_11, %c0_12] : memref<128x128xf32, #tpu.memory_space<vmem>>, vector<128x128xf32>
    tpu.vector_store %arg5[%c0_11, %c0_12], %21 {strides = array<i32>} : memref<128x128xf32, #tpu.memory_space<vmem>>, vector<128x128xf32>,
    return
  }
  func.func @transform_0(%arg0: i32) -> (i32, i32) {
    %c0_i32 = arith.constant 0 : i32
    %c0_i32_0 = arith.constant 0 : i32
    return %arg0, %c0_i32 : i32, i32
  }
  func.func @transform_1(%arg0: i32) -> (i32, i32) {
    %c0_i32 = arith.constant 0 : i32
    %c0_i32_0 = arith.constant 0 : i32
    %c0_i32_1 = arith.constant 0 : i32
    return %c0_i32, %c0_i32_0 : i32, i32
  }
  func.func @transform_2(%arg0: i32) -> (i32, i32) {
    %c0_i32 = arith.constant 0 : i32
    %c0_i32_0 = arith.constant 0 : i32
    %c0_i32_1 = arith.constant 0 : i32
    return %c0_i32, %c0_i32_0 : i32, i32
  }
  func.func @transform_3(%arg0: i32) -> (i32, i32) {
    %c0_i32 = arith.constant 0 : i32
    %c0_i32_0 = arith.constant 0 : i32
    %c0_i32_1 = arith.constant 0 : i32
    return %c0_i32, %c0_i32_0 : i32, i32
  }
  func.func @transform_4(%arg0: i32) -> (i32, i32) {
    %c0_i32 = arith.constant 0 : i32
    %c0_i32_0 = arith.constant 0 : i32
    return %arg0, %c0_i32 : i32, i32
  }
}

</mosaic_0001>

<llo_original>
// kernel: tpu_custom_call.1
$region0: #{tpu_custom_call.1}
  #allocation0 [shape = 'u32[]', space=smem, size = 0x4, offset = 0x4, fixed_abs, tag = 'smem constant byte address 0x4 - core index']
  #allocation1 [shape = 'u32[144,128]{1,0:T(1,128)}', space=vmem, size = 0x12000, scoped, tag = 'internal scratch']
  %s0 = inlined_call_operand.vmem [shape: bf16[128,36], index: 0, kind: input, shape index: {}]
  %s1 = inlined_call_operand.vmem [shape: bf16[36,128], index: 1, kind: input, shape index: {}]
  %s2 = inlined_call_operand.vmem [shape: f32[1,128], index: 2, kind: input, shape index: {}]
  %s3 = inlined_call_operand.vmem [shape: f32[1,128], index: 3, kind: input, shape index: {}]
  %s4 = inlined_call_operand.hbm [shape: f32[128,128], index: 4, kind: output, shape index: {}]
  %s5 = sld [smem:[#allocation0]]
  $region26: #{tpu_custom_call.1} parent=0
    _
  %s7 = ssub.s32 1, %s5
  %s8 = scalar_select 0, %s7, %s5
  $region1: #{tpu_custom_call.1} parent=0
    #allocation2 [shape = 'u8[65536]{0}', space=vmem, size = 0x10000, scoped, tag = 'output window, operand 0, single buffered']
    #allocation3 [shape = 's32[1]{0}', space=sflag, size = 0x4, scoped, tag = 'scoped memory for tpu_custom_call.1']
    %9 = vsyncpa [#allocation3], 0
    // Predicated region
    $region2: #{tpu_custom_call.1} parent=1 // pred_check
      _
    $region3: #{tpu_custom_call.1} parent=1 // pred_check_branch
      %11 = sbr.rel (0) target = $region5
    $region4: #{tpu_custom_call.1} parent=1 // pred_region
      _
    $region5: #{tpu_custom_call.1} parent=1 // pred_fallthru
      _
    // Predicated region
    $region6: #{tpu_custom_call.1} parent=1 // pred_check
      _
    $region7: #{tpu_custom_call.1} parent=1 // pred_check_branch
      %13 = sbr.rel (0) target = $region9
    $region8: #{tpu_custom_call.1} parent=1 // pred_region
      _
    $region9: #{tpu_custom_call.1} parent=1 // pred_fallthru
      _
    // Predicated region
    $region10: #{tpu_custom_call.1} parent=1 // pred_check
      _
    $region11: #{tpu_custom_call.1} parent=1 // pred_check_branch
      %15 = sbr.rel (0) target = $region13
    $region12: #{tpu_custom_call.1} parent=1 // pred_region
      _
    $region13: #{tpu_custom_call.1} parent=1 // pred_fallthru
      _
    // Predicated region
    $region14: #{tpu_custom_call.1} parent=1 // pred_check
      _
    $region15: #{tpu_custom_call.1} parent=1 // pred_check_branch
      %17 = sbr.rel (0) target = $region17
    $region16: #{tpu_custom_call.1} parent=1 // pred_region
      _
    $region17: #{tpu_custom_call.1} parent=1 // pred_fallthru
      _
    %v19 = vld [vmem:[%s0] sm:$0xf]
    %v20 = vld [vmem:[%s0 + $0x4] sm:$0xf]
    %v21 = vld [vmem:[%s0 + $0x8] sm:$0xf]
    %v22 = vld [vmem:[%s0 + $0xc] sm:$0xf]
    %v23 = vld [vmem:[%s0 + $0x10] sm:$0xf]
    %v24 = vld [vmem:[%s0 + $0x14] sm:$0xf]
    %v25 = vld [vmem:[%s0 + $0x18] sm:$0xf]
    %v26 = vld [vmem:[%s0 + $0x1c] sm:$0xf]
    %v27 = vld [vmem:[%s0 + $0x20] sm:$0xf]
    %v28 = vld [vmem:[%s0 + $0x24] sm:$0xf]
    %v29 = vld [vmem:[%s0 + $0x28] sm:$0xf]
    %v30 = vld [vmem:[%s0 + $0x2c] sm:$0xf]
    %v31 = vld [vmem:[%s0 + $0x30] sm:$0xf]
    %v32 = vld [vmem:[%s0 + $0x34] sm:$0xf]
    %v33 = vld [vmem:[%s0 + $0x38] sm:$0xf]
    %v34 = vld [vmem:[%s0 + $0x3c] sm:$0xf]
    %v35 = vld [vmem:[%s1] sm:$0xf]
    %v36 = vld [vmem:[%s1 + $0x4] sm:$0xf]
    %v37 = vld [vmem:[%s1 + $0x8] sm:$0xf]
    %v38 = vld [vmem:[%s1 + $0xc] sm:$0xf]
    %v39 = vld [vmem:[%s1 + $0x10] sm:$0x3]
    %v56 = vunpack.c.l.b16 %v19
    %v57 = vunpack.c.l.b16 %v20
    %v58 = vunpack.c.l.b16 %v21
    %v59 = vunpack.c.l.b16 %v22
    %v60 = vunpack.c.l.b16 %v23
    %v61 = vunpack.c.l.b16 %v24
    %v62 = vunpack.c.l.b16 %v25
    %v63 = vunpack.c.l.b16 %v26
    %v64 = vunpack.c.l.b16 %v27
    %v65 = vunpack.c.l.b16 %v28
    %v66 = vunpack.c.l.b16 %v29
    %v67 = vunpack.c.l.b16 %v30
    %v68 = vunpack.c.l.b16 %v31
    %v69 = vunpack.c.l.b16 %v32
    %v70 = vunpack.c.l.b16 %v33
    %v71 = vunpack.c.l.b16 %v34
    %v72 = vpack.c.b16 %v57, %v56
    %v73 = vpack.c.b16 %v59, %v58
    %v74 = vpack.c.b16 %v61, %v60
    %v75 = vpack.c.b16 %v63, %v62
    %v76 = vpack.c.b16 %v65, %v64
    %v77 = vpack.c.b16 %v67, %v66
    %v78 = vpack.c.b16 %v69, %v68
    %v79 = vpack.c.b16 %v71, %v70
    %v85 = vunpack.c.l.b16 %v35
    %v86 = vunpack.c.l.b16 %v36
    %v87 = vunpack.c.l.b16 %v37
    %v88 = vunpack.c.l.b16 %v38
    %v89 = vunpack.c.l.b16 %v39
    %v90 = vpack.c.b16 %v86, %v85
    %v91 = vpack.c.b16 %v88, %v87
    %v92 = vpack.c.b16 %v89, %v89
    %vm95 = vcmask 293888
    %v97 = vsel %vm95, %v72, 0
    %v100 = vsel %vm95, %v73, 0
    %v103 = vsel %vm95, %v74, 0
    %v106 = vsel %vm95, %v75, 0
    %v109 = vsel %vm95, %v76, 0
    %v112 = vsel %vm95, %v77, 0
    %v115 = vsel %vm95, %v78, 0
    %v118 = vsel %vm95, %v79, 0
    %vm120 = vcmask 1041408
    %v122 = vsel %vm120, %v92, 0
    %124 = vmatprep.subr.bf16.mxu0 0
    %125 = vmatpush1.bf16.msra.mxu0 %v90
    %126 = vmatprep.subr.bf16.mxu0 0
    %127 = vmatpush1.bf16.msra.mxu0 %v91
    %128 = vmatprep.subr.bf16.mxu0 0
    %129 = vmatpush1.bf16.msra.mxu0 %v122
    %130 = vmatprep.subr.bf16.mxu0 0
    %131 = vmatpush1.bf16.msra.mxu0 0
    %132 = vmatprep.subr.bf16.mxu0 0
    %133 = vmatpush1.bf16.msra.mxu0 0
    %134 = vmatprep.subr.bf16.mxu0 0
    %135 = vmatpush1.bf16.msra.mxu0 0
    %136 = vmatprep.subr.bf16.mxu0 0
    %137 = vmatpush1.bf16.msra.mxu0 0
    %138 = vmatprep.subr.bf16.mxu0 0
    %139 = vmatpush1.bf16.msra.mxu0 0
    %140 = vmatprep.subr.bf16.mxu0 0
    %141 = vmatpush1.bf16.msra.mxu0 0
    %142 = vmatprep.subr.bf16.mxu0 0
    %143 = vmatpush1.bf16.msra.mxu0 0
    %144 = vmatprep.subr.bf16.mxu0 0
    %145 = vmatpush1.bf16.msra.mxu0 0
    %146 = vmatprep.subr.bf16.mxu0 0
    %147 = vmatpush1.bf16.msra.mxu0 0
    %148 = vmatprep.subr.bf16.mxu0 0
    %149 = vmatpush1.bf16.msra.mxu0 0
    %150 = vmatprep.subr.bf16.mxu0 0
    %151 = vmatpush1.bf16.msra.mxu0 0
    %152 = vmatprep.subr.bf16.mxu0 0
    %153 = vmatpush1.bf16.msra.mxu0 0
    %154 = vmatprep.subr.bf16.mxu0 0
    %155 = vmatpush1.bf16.msra.mxu0 0
    %156 = vmatprep.mubr.bf16.mxu0 0
    %157 = vmatmul.mubr.bf16.gmra.mrb[0].mxu0 %v97
    %v158 = vpop.f32.mrb[0].mxu0
    %v159 = vadd.f32 0.0, %v158
    %v160 = vpop.f32.mrb[0].mxu0
    %v161 = vpop.f32.mrb[0].mxu0
    %v162 = vadd.f32 0.0, %v161
    %v163 = vpop.f32.mrb[0].mxu0
    %164 = vmatprep.mubr.bf16.mxu0 0
    %165 = vmatmul.mubr.bf16.gmra.mrb[0].mxu0 %v100
    %v166 = vpop.f32.mrb[0].mxu0
    %v167 = vadd.f32 0.0, %v166
    %v168 = vpop.f32.mrb[0].mxu0
    %v169 = vpop.f32.mrb[0].mxu0
    %v170 = vadd.f32 0.0, %v169
    %v171 = vpop.f32.mrb[0].mxu0
    %172 = vmatprep.mubr.bf16.mxu0 0
    %173 = vmatmul.mubr.bf16.gmra.mrb[0].mxu0 %v103
    %v174 = vpop.f32.mrb[0].mxu0
    %v175 = vadd.f32 0.0, %v174
    %v176 = vpop.f32.mrb[0].mxu0
    %v177 = vpop.f32.mrb[0].mxu0
    %v178 = vadd.f32 0.0, %v177
    %v179 = vpop.f32.mrb[0].mxu0
    %180 = vmatprep.mubr.bf16.mxu0 0
    %181 = vmatmul.mubr.bf16.gmra.mrb[0].mxu0 %v106
    %v182 = vpop.f32.mrb[0].mxu0
    %v183 = vadd.f32 0.0, %v182
    %v184 = vpop.f32.mrb[0].mxu0
    %v185 = vpop.f32.mrb[0].mxu0
    %v186 = vadd.f32 0.0, %v185
    %v187 = vpop.f32.mrb[0].mxu0
    %188 = vmatprep.mubr.bf16.mxu0 0
    %189 = vmatmul.mubr.bf16.gmra.mrb[0].mxu0 %v109
    %v190 = vpop.f32.mrb[0].mxu0
    %v191 = vadd.f32 0.0, %v190
    %v192 = vpop.f32.mrb[0].mxu0
    %v193 = vpop.f32.mrb[0].mxu0
    %v194 = vadd.f32 0.0, %v193
    %v195 = vpop.f32.mrb[0].mxu0
    %196 = vmatprep.mubr.bf16.mxu0 0
    %197 = vmatmul.mubr.bf16.gmra.mrb[0].mxu0 %v112
    %v198 = vpop.f32.mrb[0].mxu0
    %v199 = vadd.f32 0.0, %v198
    %v200 = vpop.f32.mrb[0].mxu0
    %v201 = vpop.f32.mrb[0].mxu0
    %v202 = vadd.f32 0.0, %v201
    %v203 = vpop.f32.mrb[0].mxu0
    %204 = vmatprep.mubr.bf16.mxu0 0
    %205 = vmatmul.mubr.bf16.gmra.mrb[0].mxu0 %v115
    %v206 = vpop.f32.mrb[0].mxu0
    %v207 = vadd.f32 0.0, %v206
    %v208 = vpop.f32.mrb[0].mxu0
    %v209 = vpop.f32.mrb[0].mxu0
    %v210 = vadd.f32 0.0, %v209
    %v211 = vpop.f32.mrb[0].mxu0
    %212 = vmatprep.mubr.bf16.mxu0 0
    %213 = vmatmul.mubr.bf16.gmra.mrb[0].mxu0 %v118
    %v214 = vpop.f32.mrb[0].mxu0
    %v215 = vadd.f32 0.0, %v214
    %v216 = vpop.f32.mrb[0].mxu0
    %v217 = vpop.f32.mrb[0].mxu0
    %v218 = vadd.f32 0.0, %v217
    %v219 = vpop.f32.mrb[0].mxu0
    %220 = vdwg.mxu0
    %v221 = vld [vmem:[%s2] sm:$0x1]
    %v223 = vlaneseq
    %v224 = vshrl.u32 %v223, 7
    %v225 = vsub.s32 0, %v224
    %v226 = vrot.slane %v221, %v225
    %v228 = vmul.f32 %v159, %v226
    %v229 = vmul.f32 %v162, %v226
    %v230 = vmul.f32 %v167, %v226
    %v231 = vmul.f32 %v170, %v226
    %v232 = vmul.f32 %v175, %v226
    %v233 = vmul.f32 %v178, %v226
    %v234 = vmul.f32 %v183, %v226
    %v235 = vmul.f32 %v186, %v226
    %v236 = vmul.f32 %v191, %v226
    %v237 = vmul.f32 %v194, %v226
    %v238 = vmul.f32 %v199, %v226
    %v239 = vmul.f32 %v202, %v226
    %v240 = vmul.f32 %v207, %v226
    %v241 = vmul.f32 %v210, %v226
    %v242 = vmul.f32 %v215, %v226
    %v243 = vmul.f32 %v218, %v226
    %v244 = vld [vmem:[%s3] sm:$0x1]
    %v246 = vlaneseq
    %v247 = vshrl.u32 %v246, 7
    %v248 = vsub.s32 0, %v247
    %v249 = vrot.slane %v244, %v248
    %v251 = vadd.f32 %v228, %v249
    %v252 = vadd.f32 %v229, %v249
    %v253 = vadd.f32 %v230, %v249
    %v254 = vadd.f32 %v231, %v249
    %v255 = vadd.f32 %v232, %v249
    %v256 = vadd.f32 %v233, %v249
    %v257 = vadd.f32 %v234, %v249
    %v258 = vadd.f32 %v235, %v249
    %v259 = vadd.f32 %v236, %v249
    %v260 = vadd.f32 %v237, %v249
    %v261 = vadd.f32 %v238, %v249
    %v262 = vadd.f32 %v239, %v249
    %v263 = vadd.f32 %v240, %v249
    %v264 = vadd.f32 %v241, %v249
    %v265 = vadd.f32 %v242, %v249
    %v266 = vadd.f32 %v243, %v249
    %v267 = vmul.f32 %v251, 0.044715
    %v268 = vmul.f32 %v252, 0.044715
    %v269 = vmul.f32 %v253, 0.044715
    %v270 = vmul.f32 %v254, 0.044715
    %v271 = vmul.f32 %v255, 0.044715
    %v272 = vmul.f32 %v256, 0.044715
    %v273 = vmul.f32 %v257, 0.044715
    %v274 = vmul.f32 %v258, 0.044715
    %v275 = vmul.f32 %v259, 0.044715
    %v276 = vmul.f32 %v260, 0.044715
    %v277 = vmul.f32 %v261, 0.044715
    %v278 = vmul.f32 %v262, 0.044715
    %v279 = vmul.f32 %v263, 0.044715
    %v280 = vmul.f32 %v264, 0.044715
    %v281 = vmul.f32 %v265, 0.044715
    %v282 = vmul.f32 %v266, 0.044715
    %v283 = vmul.f32 %v267, %v251
    %v284 = vmul.f32 %v268, %v252
    %v285 = vmul.f32 %v269, %v253
    %v286 = vmul.f32 %v270, %v254
    %v287 = vmul.f32 %v271, %v255
    %v288 = vmul.f32 %v272, %v256
    %v289 = vmul.f32 %v273, %v257
    %v290 = vmul.f32 %v274, %v258
    %v291 = vmul.f32 %v275, %v259
    %v292 = vmul.f32 %v276, %v260
    %v293 = vmul.f32 %v277, %v261
    %v294 = vmul.f32 %v278, %v262
    %v295 = vmul.f32 %v279, %v263
    %v296 = vmul.f32 %v280, %v264
    %v297 = vmul.f32 %v281, %v265
    %v298 = vmul.f32 %v282, %v266
    %v299 = vmul.f32 %v283, %v251
    %v300 = vmul.f32 %v284, %v252
    %v301 = vmul.f32 %v285, %v253
    %v302 = vmul.f32 %v286, %v254
    %v303 = vmul.f32 %v287, %v255
    %v304 = vmul.f32 %v288, %v256
    %v305 = vmul.f32 %v289, %v257
    %v306 = vmul.f32 %v290, %v258
    %v307 = vmul.f32 %v291, %v259
    %v308 = vmul.f32 %v292, %v260
    %v309 = vmul.f32 %v293, %v261
    %v310 = vmul.f32 %v294, %v262
    %v311 = vmul.f32 %v295, %v263
    %v312 = vmul.f32 %v296, %v264
    %v313 = vmul.f32 %v297, %v265
    %v314 = vmul.f32 %v298, %v266
    %v315 = vadd.f32 %v251, %v299
    %v316 = vadd.f32 %v252, %v300
    %v317 = vadd.f32 %v253, %v301
    %v318 = vadd.f32 %v254, %v302
    %v319 = vadd.f32 %v255, %v303
    %v320 = vadd.f32 %v256, %v304
    %v321 = vadd.f32 %v257, %v305
    %v322 = vadd.f32 %v258, %v306
    %v323 = vadd.f32 %v259, %v307
    %v324 = vadd.f32 %v260, %v308
    %v325 = vadd.f32 %v261, %v309
    %v326 = vadd.f32 %v262, %v310
    %v327 = vadd.f32 %v263, %v311
    %v328 = vadd.f32 %v264, %v312
    %v329 = vadd.f32 %v265, %v313
    %v330 = vadd.f32 %v266, %v314
    %v331 = vmul.f32 %v315, 0.7978846
    %v332 = vmul.f32 %v316, 0.7978846
    %v333 = vmul.f32 %v317, 0.7978846
    %v334 = vmul.f32 %v318, 0.7978846
    %v335 = vmul.f32 %v319, 0.7978846
    %v336 = vmul.f32 %v320, 0.7978846
    %v337 = vmul.f32 %v321, 0.7978846
    %v338 = vmul.f32 %v322, 0.7978846
    %v339 = vmul.f32 %v323, 0.7978846
    %v340 = vmul.f32 %v324, 0.7978846
    %v341 = vmul.f32 %v325, 0.7978846
    %v342 = vmul.f32 %v326, 0.7978846
    %v343 = vmul.f32 %v327, 0.7978846
    %v344 = vmul.f32 %v328, 0.7978846
    %v345 = vmul.f32 %v329, 0.7978846
    %v346 = vmul.f32 %v330, 0.7978846
    %v347 = vmul.f32 %v251, 0.5
    %v348 = vmul.f32 %v252, 0.5
    %v349 = vmul.f32 %v253, 0.5
    %v350 = vmul.f32 %v254, 0.5
    %v351 = vmul.f32 %v255, 0.5
    %v352 = vmul.f32 %v256, 0.5
    %v353 = vmul.f32 %v257, 0.5
    %v354 = vmul.f32 %v258, 0.5
    %v355 = vmul.f32 %v259, 0.5
    %v356 = vmul.f32 %v260, 0.5
    %v357 = vmul.f32 %v261, 0.5
    %v358 = vmul.f32 %v262, 0.5
    %v359 = vmul.f32 %v263, 0.5
    %v360 = vmul.f32 %v264, 0.5
    %v361 = vmul.f32 %v265, 0.5
    %v362 = vmul.f32 %v266, 0.5
    %v363 = vtanh.pop %v331
    %v364 = vtanh.pop %v332
    %v365 = vtanh.pop %v333
    %v366 = vtanh.pop %v334
    %v367 = vtanh.pop %v335
    %v368 = vtanh.pop %v336
    %v369 = vtanh.pop %v337
    %v370 = vtanh.pop %v338
    %v371 = vtanh.pop %v339
    %v372 = vtanh.pop %v340
    %v373 = vtanh.pop %v341
    %v374 = vtanh.pop %v342
    %v375 = vtanh.pop %v343
    %v376 = vtanh.pop %v344
    %v377 = vtanh.pop %v345
    %v378 = vtanh.pop %v346
    %v379 = vadd.f32 %v363, 1.0
    %v380 = vadd.f32 %v364, 1.0
    %v381 = vadd.f32 %v365, 1.0
    %v382 = vadd.f32 %v366, 1.0
    %v383 = vadd.f32 %v367, 1.0
    %v384 = vadd.f32 %v368, 1.0
    %v385 = vadd.f32 %v369, 1.0
    %v386 = vadd.f32 %v370, 1.0
    %v387 = vadd.f32 %v371, 1.0
    %v388 = vadd.f32 %v372, 1.0
    %v389 = vadd.f32 %v373, 1.0
    %v390 = vadd.f32 %v374, 1.0
    %v391 = vadd.f32 %v375, 1.0
    %v392 = vadd.f32 %v376, 1.0
    %v393 = vadd.f32 %v377, 1.0
    %v394 = vadd.f32 %v378, 1.0
    %v395 = vmul.f32 %v347, %v379
    %v396 = vmul.f32 %v348, %v380
    %v397 = vmul.f32 %v349, %v381
    %v398 = vmul.f32 %v350, %v382
    %v399 = vmul.f32 %v351, %v383
    %v400 = vmul.f32 %v352, %v384
    %v401 = vmul.f32 %v353, %v385
    %v402 = vmul.f32 %v354, %v386
    %v403 = vmul.f32 %v355, %v387
    %v404 = vmul.f32 %v356, %v388
    %v405 = vmul.f32 %v357, %v389
    %v406 = vmul.f32 %v358, %v390
    %v407 = vmul.f32 %v359, %v391
    %v408 = vmul.f32 %v360, %v392
    %v409 = vmul.f32 %v361, %v393
    %v410 = vmul.f32 %v362, %v394
    %411 = vst [vmem:[#allocation2] sm:$0xff] %v395
    %412 = vst [vmem:[#allocation2 + $0x8] sm:$0xff] %v396
    %413 = vst [vmem:[#allocation2 + $0x10] sm:$0xff] %v397
    %414 = vst [vmem:[#allocation2 + $0x18] sm:$0xff] %v398
    %415 = vst [vmem:[#allocation2 + $0x20] sm:$0xff] %v399
    %416 = vst [vmem:[#allocation2 + $0x28] sm:$0xff] %v400
    %417 = vst [vmem:[#allocation2 + $0x30] sm:$0xff] %v401
    %418 = vst [vmem:[#allocation2 + $0x38] sm:$0xff] %v402
    %419 = vst [vmem:[#allocation2 + $0x40] sm:$0xff] %v403
    %420 = vst [vmem:[#allocation2 + $0x48] sm:$0xff] %v404
    %421 = vst [vmem:[#allocation2 + $0x50] sm:$0xff] %v405
    %422 = vst [vmem:[#allocation2 + $0x58] sm:$0xff] %v406
    %423 = vst [vmem:[#allocation2 + $0x60] sm:$0xff] %v407
    %424 = vst [vmem:[#allocation2 + $0x68] sm:$0xff] %v408
    %425 = vst [vmem:[#allocation2 + $0x70] sm:$0xff] %v409
    %426 = vst [vmem:[#allocation2 + $0x78] sm:$0xff] %v410
    // Predicated region
    $region18: #{tpu_custom_call.1} parent=1 // pred_check
      _
    $region19: #{tpu_custom_call.1} parent=1 // pred_check_branch
      %428 = sbr.rel (0) target = $region21
    $region20: #{tpu_custom_call.1} parent=1 // pred_region
      %s430 = ssub.s32 2048, 2048
      %431 = vsyncadd [#allocation3], %s430
      %s432 = sshll.u32 [#allocation2], 4
      %s433 = int_to_ptr.vmem [resolvable:$true] %s432
      %438 = dma.vmem_to_hbm [thread:$0]  %s433, 2048, %s4, [#allocation3], 128, 128, 8
    $region21: #{tpu_custom_call.1} parent=1 // pred_fallthru
      _
    // Predicated region
    $region22: #{tpu_custom_call.1} parent=1 // pred_check
      _
    $region23: #{tpu_custom_call.1} parent=1 // pred_check_branch
      %440 = sbr.rel (0) target = $region25
    $region24: #{tpu_custom_call.1} parent=1 // pred_region
      %441 = dma.done [#allocation3], 2048
    $region25: #{tpu_custom_call.1} parent=1 // pred_fallthru
      _
    %442 = vsyncpa [#allocation3], 1

</llo_original>
